<compile_context>
chip_gen: v6e
topology: v6e:2x2x1
jax: 0.10.0
libtpu: 0.0.40
codegen_flags: <defaults>
</compile_context>

<pallas_src>
import jax
import jax.numpy as jnp
from jax.experimental import pallas as pl
from jax.experimental.pallas import tpu as pltpu


_MAX_LANE_W = 512    # widest lane-dense width we try (multiple of 128 lanes)
_TILE_ROWS = 2048    # max rows per tile: 2048*512*4B = 4 MiB f32 tile


def _scale_kernel(scale_ref, x_ref, o_ref):
    # scale_ref: SMEM (1, 1) f32 scalar; x_ref / o_ref: VMEM (tr, w) tiles.
    s = scale_ref[0, 0]  # read once; scalar * vector on the VPU
    o_ref[...] = (x_ref[...].astype(jnp.float32) * s).astype(o_ref.dtype)


def _round_up(n: int, m: int) -> int:
    return ((n + m - 1) // m) * m


def scale_forward(x: jax.Array, scale: jax.Array, out_dtype=None) -> jax.Array:
    """ActionFormer Scale: out = x * scale (learnable f32 scalar).

    out_dtype=None follows PyTorch promotion (result_type(x, f32)).  Pass
    e.g. out_dtype=jnp.bfloat16 to keep bf16 activations in bf16 and halve
    the HBM write traffic when the consumer immediately casts back down.
    """
    if out_dtype is None:
        out_dtype = jnp.result_type(x.dtype, jnp.float32)
    scale_f32 = jnp.asarray(scale, dtype=jnp.float32)

    size = int(x.size)
    orig_shape = x.shape

    # Ragged sizes (not a multiple of 128 lanes): a Pallas path would need a
    # full pad + slice (two extra HBM passes); the fused XLA multiply is
    # already at the 2N-byte roofline, so use it for this (rare) case.
    if size == 0 or size % 128 != 0:
        return (x.astype(jnp.float32) * scale_f32).astype(out_dtype)

    # ---- lane-dense 2D layout: no pad, no trailing slice ------------------
    if size % _MAX_LANE_W == 0:
        w = _MAX_LANE_W
    elif size % 256 == 0:
        w = 256
    else:
        w = 128
    rows = size // w
    x2d = x.reshape(rows, w)              # contiguous reshape: free

    # Tile rows: aim for >= 2 tiles (feeds both v7x TensorCores), cap at
    # _TILE_ROWS.  Ragged last block is masked by Pallas (no dead rows DMA'd).
    if rows <= 8:
        tr = rows                         # single block == full first dim
    else:
        tr = min(_TILE_ROWS, _round_up(pl.cdiv(rows, 2), 8))
    num_tiles = pl.cdiv(rows, tr)

    scale2d = scale_f32.reshape(1, 1)

    out2d = pl.pallas_call(
        _scale_kernel,
        out_shape=jax.ShapeDtypeStruct((rows, w), out_dtype),
        grid_spec=pltpu.PrefetchScalarGridSpec(
            num_scalar_prefetch=0,
            grid=(num_tiles,),
            in_specs=[
                pl.BlockSpec(memory_space=pltpu.MemorySpace.SMEM),  # scalar
                pl.BlockSpec((tr, w), lambda i: (i, 0)),            # input tile
            ],
            out_specs=pl.BlockSpec((tr, w), lambda i: (i, 0)),
        ),
        compiler_params=pltpu.CompilerParams(
            dimension_semantics=("parallel",),     # megacore sharding on v7x
            vmem_limit_bytes=32 * 1024 * 1024,     # headroom for 4 MiB tiles
        ),
    )(scale2d, x2d)

    return out2d.reshape(orig_shape)


if __name__ == "__main__":
    key = jax.random.PRNGKey(0)

    # Deterministic parameter init, matching nn.Parameter(torch.tensor(1.0))
    scale_param = jnp.asarray(1.0, dtype=jnp.float32)

    # --- main case: ActionFormer regression-head output (B, C, T), f32 -----
    B, C, T = 2, 4, 16
    x = jax.random.normal(key, (B, C, T), dtype=jnp.float32)
    out = jax.block_until_ready(scale_forward(x, scale_param))
    expected = x * scale_param
    assert out.shape == x.shape and out.dtype == x.dtype
    assert jnp.allclose(out, expected, atol=1e-6, rtol=1e-6)

    # --- multi-tile grid with a ragged (masked) last block, scale != 1 -----
    k1, k2, k3 = jax.random.split(key, 3)
    s2 = jnp.asarray(0.5, dtype=jnp.float32)
    x2 = jax.random.normal(k1, (3, 4, 1024), dtype=jnp.float32)
    out2 = jax.block_until_ready(scale_forward(x2, s2))
    assert jnp.allclose(out2, x2 * s2, atol=1e-6, rtol=1e-6)

    # --- bf16 input with bf16 output override (halved write traffic) -------
    x3 = jax.random.normal(k2, (2, 4, 64), dtype=jnp.bfloat16)
    out3 = jax.block_until_ready(scale_forward(x3, s2, out_dtype=jnp.bfloat16))
    exp3 = (x3.astype(jnp.float32) * s2).astype(jnp.bfloat16)
    assert out3.dtype == jnp.bfloat16
    assert jnp.allclose(out3.astype(jnp.float32), exp3.astype(jnp.float32),
                        atol=1e-2, rtol=1e-2)

    # --- ragged size (not a multiple of 128 lanes): XLA fallback path ------
    x4 = jax.random.normal(k3, (2, 3, 10), dtype=jnp.float32)
    out4 = jax.block_until_ready(scale_forward(x4, s2))
    assert jnp.allclose(out4, x4 * s2, atol=1e-6, rtol=1e-6)

    print("KERNEL_OK")
</pallas_src>

<mosaic_0001>
module attributes {stable_mosaic.version = 11 : i64} {
  func.func @_scale_kernel(%arg0: i32, %arg1: memref<1x1xf32, #tpu.memory_space<smem>>, %arg2: memref<1x128xf32, #tpu.memory_space<vmem>>, %arg3: memref<1x128xf32, #tpu.memory_space<vmem>>) attributes {dimension_semantics = [#tpu.dimension_semantics<parallel>], iteration_bounds = array<i64: 1>, scalar_prefetch = 0 : i64, scratch_operands = 0 : i64, tpu.core_type = #tpu.core_type<tc>, window_params = [{transform_indices = @transform_0, window_bounds = array<i64: 1, 1>}, {transform_indices = @transform_1, window_bounds = array<i64: 1, 128>}, {transform_indices = @transform_2, window_bounds = array<i64: 1, 128>}]} {
    %c0 = arith.constant 0 : index
    %c0_0 = arith.constant 0 : index
    %0 = memref.load %arg1[%c0, %c0_0] : memref<1x1xf32, #tpu.memory_space<smem>>
    %c0_1 = arith.constant 0 : index
    %c0_2 = arith.constant 0 : index
    %1 = vector.load %arg2[%c0_1, %c0_2] : memref<1x128xf32, #tpu.memory_space<vmem>>, vector<1x128xf32>
    %2 = vector.broadcast %0 : f32 to vector<1x128xf32>
    %3 = arith.mulf %1, %2 : vector<1x128xf32>
    %c0_3 = arith.constant 0 : index
    %c0_4 = arith.constant 0 : index
    %4 = vector.load %arg3[%c0_3, %c0_4] : memref<1x128xf32, #tpu.memory_space<vmem>>, vector<1x128xf32>
    tpu.vector_store %arg3[%c0_3, %c0_4], %3 {strides = array<i32>} : memref<1x128xf32, #tpu.memory_space<vmem>>, vector<1x128xf32>,
    return
  }
  func.func @transform_0(%arg0: i32) -> (i32, i32) {
    %c0_i32 = arith.constant 0 : i32
    %c0_i32_0 = arith.constant 0 : i32
    %c0_i32_1 = arith.constant 0 : i32
    return %c0_i32, %c0_i32_0 : i32, i32
  }
  func.func @transform_1(%arg0: i32) -> (i32, i32) {
    %c0_i32 = arith.constant 0 : i32
    %c0_i32_0 = arith.constant 0 : i32
    return %arg0, %c0_i32 : i32, i32
  }
  func.func @transform_2(%arg0: i32) -> (i32, i32) {
    %c0_i32 = arith.constant 0 : i32
    %c0_i32_0 = arith.constant 0 : i32
    return %arg0, %c0_i32 : i32, i32
  }
}

</mosaic_0001>

<llo_original>
// kernel: tpu_custom_call.1
$region0: #{tpu_custom_call.1}
  #allocation0 [shape = 'u32[]', space=smem, size = 0x4, offset = 0x4, fixed_abs, tag = 'smem constant byte address 0x4 - core index']
  #allocation1 [shape = 'u32[144,128]{1,0:T(1,128)}', space=vmem, size = 0x12000, scoped, tag = 'internal scratch']
  #allocation2 [shape = 'f32[1,1]{1,0:T(1,128)S(6)}', space=smem, size = 0x200, scoped, tag = 'scoped memory for tpu_custom_call.1']
  %s0 = inlined_call_operand.<no memory space> [shape: f32[1,1], index: 0, kind: input, shape index: {}]
  %s1 = inlined_call_operand.vmem [shape: f32[1,128], index: 1, kind: input, shape index: {}]
  %s2 = inlined_call_operand.hbm [shape: f32[1,128], index: 2, kind: output, shape index: {}]
  %s3 = sld [smem:[#allocation0]]
  $region18: #{tpu_custom_call.1} parent=0
    _
  %s5 = ssub.s32 1, %s3
  %s6 = scalar_select 0, %s5, %s3
  %7 = sst [smem:[#allocation2]] %s0
  $region1: #{tpu_custom_call.1} parent=0
    #allocation3 [shape = 'u8[512]{0}', space=vmem, size = 0x400, scoped, tag = 'output window, operand 0, single buffered']
    #allocation4 [shape = 's32[1]{0}', space=sflag, size = 0x4, scoped, tag = 'scoped memory for tpu_custom_call.1']
    %8 = vsyncpa [#allocation4], 0
    // Predicated region
    $region2: #{tpu_custom_call.1} parent=1 // pred_check
      _
    $region3: #{tpu_custom_call.1} parent=1 // pred_check_branch
      %10 = sbr.rel (0) target = $region5
    $region4: #{tpu_custom_call.1} parent=1 // pred_region
      _
    $region5: #{tpu_custom_call.1} parent=1 // pred_fallthru
      _
    // Predicated region
    $region6: #{tpu_custom_call.1} parent=1 // pred_check
      _
    $region7: #{tpu_custom_call.1} parent=1 // pred_check_branch
      %12 = sbr.rel (0) target = $region9
    $region8: #{tpu_custom_call.1} parent=1 // pred_region
      _
    $region9: #{tpu_custom_call.1} parent=1 // pred_fallthru
      _
    %s13 = sld [smem:[#allocation2]]
    %v14 = vld [vmem:[%s1] sm:$0x1]
    %v15 = vstv %s13
    %v16 = vmul.f32 %v14, %v15
    %17 = vst [vmem:[#allocation3] sm:$0x1] %v16
    // Predicated region
    $region10: #{tpu_custom_call.1} parent=1 // pred_check
      _
    $region11: #{tpu_custom_call.1} parent=1 // pred_check_branch
      %19 = sbr.rel (0) target = $region13
    $region12: #{tpu_custom_call.1} parent=1 // pred_region
      %s21 = ssub.s32 16, 16
      %22 = vsyncadd [#allocation4], %s21
      %s24 = sshll.u32 [#allocation3], 4
      %s25 = int_to_ptr.vmem [resolvable:$true] %s24
      %27 = dma.vmem_to_hbm [thread:$0]  %s25, 16, %s2, [#allocation4]
    $region13: #{tpu_custom_call.1} parent=1 // pred_fallthru
      _
    // Predicated region
    $region14: #{tpu_custom_call.1} parent=1 // pred_check
      _
    $region15: #{tpu_custom_call.1} parent=1 // pred_check_branch
      %29 = sbr.rel (0) target = $region17
    $region16: #{tpu_custom_call.1} parent=1 // pred_region
      %30 = dma.done [#allocation4], 16
    $region17: #{tpu_custom_call.1} parent=1 // pred_fallthru
      _
    %31 = vsyncpa [#allocation4], 1

</llo_original>
